<compile_context>
chip_gen: v7x
topology: tpu7x:2x2x1
jax: 0.10.0
libtpu: 0.0.40
codegen_flags: <defaults>
</compile_context>

<pallas_src>
import functools

import jax
import jax.numpy as jnp
from jax.experimental import pallas as pl
from jax.experimental.pallas import tpu as pltpu

NEG_SLOPE = 0.2  # ICNN.negative_slope

# Order in which packed per-ICNN weight arrays are passed to the kernel.
_PACK_ORDER = ('wcat_t', 'bcat', 'wq_stack', 'wl_stack', 'wq_last', 'wl_last',
               'wz_t', 'wz', 'wz_last')


# -----------------------------------------------------------------------------
# Load one ICNN's packed weights from refs ONCE (hoisted out of the iteration
# loop): per-layer slabs become Python lists of traced values, small vectors
# are pre-broadcast to batch shape.
# -----------------------------------------------------------------------------
def _load_icnn_weights(refs, batch, num_layers):
    (wcat_t_ref, bcat_ref, wq_stack_ref, wl_stack_ref, wq_last_ref,
     wl_last_ref, wz_t_ref, wz_ref, wz_last_ref) = refs
    L = num_layers
    H = wz_last_ref.shape[1]
    D = wq_last_ref.shape[1]
    return {
        'H': H,
        'wcat_t': wcat_t_ref[...],                                     # (D, 2LH) bf16
        'bcat': jnp.broadcast_to(bcat_ref[...], (batch, 2 * L * H)),   # (B, 2LH) f32
        'wq': [wq_stack_ref[l] for l in range(L)],                     # (H, D) bf16 each
        'wl': [wl_stack_ref[l] for l in range(L)],                     # (H, D) bf16 each
        'wz_t': [wz_t_ref[l] for l in range(L - 1)],                   # (H, H) bf16 each
        'wz': [wz_ref[l] for l in range(L - 1)],                       # (H, H) bf16 each
        'wq_last': jnp.broadcast_to(wq_last_ref[...], (batch, D)),     # (B, D) f32
        'wl_last': jnp.broadcast_to(wl_last_ref[...], (batch, D)),     # (B, D) f32
        'g_top': jnp.broadcast_to(wz_last_ref[...], (batch, H)),       # (B, H) f32
    }


# -----------------------------------------------------------------------------
# In-kernel ICNN.forward: analytic gradient of ICNN.scalar wrt x (grad_outputs
# = ones, as torch.autograd.grad does in compute_gradient) + strong-convexity
# mix (1-sc)*grad + sc*x.  Operates on pre-loaded weight values.
# -----------------------------------------------------------------------------
def _icnn_apply(xin, w, *, num_layers, strong_convexity, neg_slope):
    L = num_layers
    sc, ns = strong_convexity, neg_slope
    H = w['H']
    x16 = xin.astype(jnp.bfloat16)

    # ---- forward: every x-dependent hidden Linear in one wide MXU dot -------
    # columns: [wq_0..wq_{L-1} | wl_0..wl_{L-1}] -> width 2*L*H (lane aligned)
    xw = jnp.dot(x16, w['wcat_t'],
                 preferred_element_type=jnp.float32) + w['bcat']       # (B, 2LH)

    u_list, dfact_list = [], []
    z = None
    for l in range(L):
        u = xw[:, l * H:(l + 1) * H]                                   # x @ wq_l.T
        pre = u * u + xw[:, (L + l) * H:(L + l + 1) * H]               # + x @ wl_l.T + b_l
        if l > 0:
            pre = pre + jnp.dot(z.astype(jnp.bfloat16), w['wz_t'][l - 1],
                                preferred_element_type=jnp.float32)
        dfact = jnp.where(pre > 0, 1.0, ns)                            # leaky_relu'
        z = pre * dfact                                                # leaky_relu
        u_list.append(u)
        dfact_list.append(dfact)

    # last-layer quadratic term: VPU multiply + lane reduce (kept f32, off MXU)
    u_last = jnp.sum(xin * w['wq_last'], axis=-1, keepdims=True)       # (B, 1)

    # ---- backward: d scalar / d x  -------------------------------------------
    # dx accumulated with per-layer dots (no lane-shuffle concatenate); each
    # layer's two dots can issue as soon as its g_pre is ready.
    dx = (2.0 * u_last) * w['wq_last'] + w['wl_last']                  # last-layer terms
    g_z = w['g_top']                                                   # d out / d z_{L-1}
    for l in range(L - 1, -1, -1):
        g_pre = g_z * dfact_list[l]
        g16 = g_pre.astype(jnp.bfloat16)
        gq16 = (g_pre * (2.0 * u_list[l])).astype(jnp.bfloat16)
        dx = dx + jnp.dot(gq16, w['wq'][l], preferred_element_type=jnp.float32)
        dx = dx + jnp.dot(g16, w['wl'][l], preferred_element_type=jnp.float32)
        if l > 0:
            g_z = jnp.dot(g16, w['wz'][l - 1], preferred_element_type=jnp.float32)

    # ICNN.forward: (1 - sc) * grad + sc * x
    return (1.0 - sc) * dx + sc * xin


# -----------------------------------------------------------------------------
# Fused ICNNCouple kernel: all NUM_ITERS iterations unrolled in one pallas_call.
# -----------------------------------------------------------------------------
def _make_couple_kernel(num_layers, strong_convexity, num_iters, grad_fun):
    apply = functools.partial(_icnn_apply, num_layers=num_layers,
                              strong_convexity=strong_convexity,
                              neg_slope=NEG_SLOPE)
    n_w = len(_PACK_ORDER)

    def kernel(stepsize_ref, x_ref, *wrefs):
        fwd_refs = wrefs[:n_w]
        bwd_refs = wrefs[n_w:2 * n_w]
        out_ref = wrefs[2 * n_w]

        x = x_ref[...]
        B = x.shape[0]

        # Loop-invariant weight loads + broadcasts: done exactly once.
        fwd_w = _load_icnn_weights(fwd_refs, B, num_layers)
        bwd_w = _load_icnn_weights(bwd_refs, B, num_layers)

        # fwd_model(x) uses the ORIGINAL x in ICNNCouple.forward -> loop-invariant.
        fx = apply(x, fwd_w)

        # num_iters is a trace-time constant -> full unroll (no scf.for), each
        # stepsize read is a static-index SMEM scalar load.
        fwd = x
        for i in range(num_iters):
            ss = stepsize_ref[i]
            fwd = apply(fx - ss * grad_fun(fwd), bwd_w)

        out_ref[...] = fwd

    return kernel


def icnn_couple_forward(fwd_packed, bwd_packed, stepsize, x, grad_fun,
                        *, num_layers, strong_convexity):
    """ICNNCouple.forward: fwd = bwd_model(fwd_model(x) - ss*gradFun(fwd)), fused."""
    B, D = x.shape
    num_iters = int(stepsize.shape[0])
    kernel = _make_couple_kernel(num_layers, strong_convexity, num_iters, grad_fun)
    smem = pl.BlockSpec(memory_space=pltpu.MemorySpace.SMEM)
    vmem = pl.BlockSpec(memory_space=pltpu.MemorySpace.VMEM)
    n_w = len(_PACK_ORDER)
    # NOTE: grid-less, everything resident in VMEM (footprint ~0.1 MB).  If the
    # batch dim is ever scaled up (B >= 256), add a grid over B tiles with
    # dimension_semantics=("parallel",) so v7x's second TensorCore is used.
    return pl.pallas_call(
        kernel,
        out_shape=jax.ShapeDtypeStruct((B, D), jnp.float32),
        in_specs=[smem, vmem] + [vmem] * (2 * n_w),
        out_specs=vmem,
    )(stepsize, x,
      *[fwd_packed[k] for k in _PACK_ORDER],
      *[bwd_packed[k] for k in _PACK_ORDER])


# -----------------------------------------------------------------------------
# Single-ICNN Pallas kernel (used only for a correctness cross-check vs jax.grad).
# -----------------------------------------------------------------------------
def _make_icnn_kernel(num_layers, strong_convexity):
    def kernel(x_ref, *refs):
        out_ref = refs[-1]
        x = x_ref[...]
        w = _load_icnn_weights(refs[:-1], x.shape[0], num_layers)
        out_ref[...] = _icnn_apply(x, w, num_layers=num_layers,
                                   strong_convexity=strong_convexity,
                                   neg_slope=NEG_SLOPE)
    return kernel


def icnn_forward(packed, x, *, num_layers, strong_convexity):
    vmem = pl.BlockSpec(memory_space=pltpu.MemorySpace.VMEM)
    kernel = _make_icnn_kernel(num_layers, strong_convexity)
    return pl.pallas_call(
        kernel,
        out_shape=jax.ShapeDtypeStruct(x.shape, jnp.float32),
        in_specs=[vmem] * (1 + len(_PACK_ORDER)),
        out_specs=vmem,
    )(x, *[packed[k] for k in _PACK_ORDER])


# -----------------------------------------------------------------------------
# Parameter init (shapes of the *used* ICNN weights) and wrapper-side packing.
# -----------------------------------------------------------------------------
def init_icnn_params(key, in_dim, hidden, num_layers):
    ks = jax.random.split(key, 7)
    # wz weights initialised positive (exp(N(-4, 0.1))), mirroring initialize_weights().
    return {
        'wq': 0.1 * jax.random.normal(ks[0], (num_layers, hidden, in_dim), jnp.float32),
        'wl': 0.1 * jax.random.normal(ks[1], (num_layers, hidden, in_dim), jnp.float32),
        'bl': 0.1 * jax.random.normal(ks[2], (num_layers, 1, hidden), jnp.float32),
        'wz': jnp.exp(-4.0 + 0.1 * jax.random.normal(
            ks[3], (num_layers - 1, hidden, hidden), jnp.float32)),
        'wq_last': 0.1 * jax.random.normal(ks[4], (1, in_dim), jnp.float32),
        'wl_last': 0.1 * jax.random.normal(ks[5], (1, in_dim), jnp.float32),
        'wz_last': jnp.exp(-4.0 + 0.1 * jax.random.normal(ks[6], (1, hidden), jnp.float32)),
    }


def pack_icnn_params(params):
    """Pre-transpose / pre-cast weights once so the kernel does plain bf16 x @ W."""
    L, H, D = params['wq'].shape
    wq_flat = params['wq'].reshape(L * H, D)
    wl_flat = params['wl'].reshape(L * H, D)
    # Lane-aligned width: exactly 2*L*H columns (wq_last handled separately).
    wcat_t = jnp.concatenate([wq_flat, wl_flat], axis=0).T.astype(jnp.bfloat16)  # (D, 2LH)
    bcat = jnp.concatenate([jnp.zeros((1, L * H), jnp.float32),
                            params['bl'].reshape(1, L * H)], axis=1)             # (1, 2LH)
    return {
        'wcat_t': wcat_t,
        'bcat': bcat,
        'wq_stack': params['wq'].astype(jnp.bfloat16),                  # (L, H, D)
        'wl_stack': params['wl'].astype(jnp.bfloat16),                  # (L, H, D)
        'wq_last': params['wq_last'],                                   # (1, D) f32
        'wl_last': params['wl_last'],                                   # (1, D) f32
        'wz_t': jnp.swapaxes(params['wz'], 1, 2).astype(jnp.bfloat16),  # fwd: z @ wz_l.T
        'wz': params['wz'].astype(jnp.bfloat16),                        # bwd: g_pre @ wz_l
        'wz_last': params['wz_last'],                                   # (1, H) f32
    }


# -----------------------------------------------------------------------------
# Pure-JAX f32 references (autodiff) for correctness checks.
# -----------------------------------------------------------------------------
def icnn_forward_ref(params, x, num_layers, sc, ns=NEG_SLOPE):
    def scalar(xv):
        z = None
        for l in range(num_layers):
            u = xv @ params['wq'][l].T
            pre = u * u + xv @ params['wl'][l].T + params['bl'][l]
            if l > 0:
                pre = pre + z @ params['wz'][l - 1].T
            z = jnp.where(pre > 0, pre, ns * pre)
        out = (z @ params['wz_last'].T
               + (xv @ params['wq_last'].T) ** 2
               + xv @ params['wl_last'].T)
        return jnp.sum(out)
    g = jax.grad(scalar)(x)
    return (1.0 - sc) * g + sc * x


def icnn_couple_ref(fwd_params, bwd_params, stepsize, x, grad_fun, num_layers, sc):
    fwd = x
    for i in range(stepsize.shape[0]):
        fx = icnn_forward_ref(fwd_params, x, num_layers, sc)
        fwd = icnn_forward_ref(bwd_params, fx - stepsize[i] * grad_fun(fwd),
                               num_layers, sc)
    return fwd


if __name__ == "__main__":
    B, IN_DIM, HIDDEN, NUM_LAYERS = 8, 16, 32, 4
    STRONG_CONVEXITY = 0.5
    NUM_ITERS = 5
    STEPSIZE_INIT, SSMIN, SSMAX = 0.01, 0.001, 0.1

    key = jax.random.PRNGKey(0)
    kx, kf, kb = jax.random.split(key, 3)

    x = jax.random.normal(kx, (B, IN_DIM), jnp.float32)
    fwd_params = init_icnn_params(kf, IN_DIM, HIDDEN, NUM_LAYERS)
    bwd_params = init_icnn_params(kb, IN_DIM, HIDDEN, NUM_LAYERS)
    stepsize = jnp.clip(STEPSIZE_INIT * jnp.ones((NUM_ITERS,), jnp.float32),
                        SSMIN, SSMAX)

    fwd_packed = pack_icnn_params(fwd_params)
    bwd_packed = pack_icnn_params(bwd_params)

    # gradFun must be supplied by the caller (PyTorch raises otherwise); here the
    # gradient of 0.5*||v||^2.  It is traced INTO the fused kernel, so it must be
    # expressible with jnp ops.
    # TODO(synk): an arbitrary user gradFun (e.g. another nn.Module) cannot be fused
    # generically; it would need its own in-kernel implementation.
    grad_fun = lambda v: v

    # sanity 1: single-ICNN Pallas kernel (analytic grad, bf16 MXU inputs) vs
    # pure-f32 jax.grad reference.  Tolerance accounts for bf16 matmul inputs.
    got = icnn_forward(fwd_packed, x, num_layers=NUM_LAYERS,
                       strong_convexity=STRONG_CONVEXITY)
    ref = icnn_forward_ref(fwd_params, x, NUM_LAYERS, STRONG_CONVEXITY)
    assert jnp.allclose(got, ref, rtol=5e-3, atol=5e-3), "ICNN gradient kernel mismatch"

    # main: fully fused ICNNCouple forward — ONE pallas_call for all iterations
    run = jax.jit(functools.partial(icnn_couple_forward, grad_fun=grad_fun,
                                    num_layers=NUM_LAYERS,
                                    strong_convexity=STRONG_CONVEXITY))
    out = run(fwd_packed, bwd_packed, stepsize, x)
    jax.block_until_ready(out)
    assert out.shape == (B, IN_DIM)

    # sanity 2: fused kernel vs pure-f32 JAX ICNNCouple loop.  Slightly looser
    # tolerance: bf16 MXU-input error compounds over the 5 chained applies.
    ref_out = icnn_couple_ref(fwd_params, bwd_params, stepsize, x, grad_fun,
                              NUM_LAYERS, STRONG_CONVEXITY)
    assert jnp.allclose(out, ref_out, rtol=1e-2, atol=1e-2), "ICNNCouple kernel mismatch"

    print("KERNEL_OK")
</pallas_src>

<mosaic_0001>
module attributes {stable_mosaic.version = 11 : i64} {
  func.func @kernel(%arg0: memref<8x16xf32, #tpu.memory_space<vmem>>, %arg1: memref<16x256xbf16, #tpu.memory_space<vmem>>, %arg2: memref<1x256xf32, #tpu.memory_space<vmem>>, %arg3: memref<4x32x16xbf16, #tpu.memory_space<vmem>>, %arg4: memref<4x32x16xbf16, #tpu.memory_space<vmem>>, %arg5: memref<1x16xf32, #tpu.memory_space<vmem>>, %arg6: memref<1x16xf32, #tpu.memory_space<vmem>>, %arg7: memref<3x32x32xbf16, #tpu.memory_space<vmem>>, %arg8: memref<3x32x32xbf16, #tpu.memory_space<vmem>>, %arg9: memref<1x32xf32, #tpu.memory_space<vmem>>, %arg10: memref<8x16xf32, #tpu.memory_space<vmem>>) attributes {dimension_semantics = [], scalar_prefetch = 0 : i64, scratch_operands = 0 : i64, tpu.core_type = #tpu.core_type<tc>} {
    %c0 = arith.constant 0 : index
    %c0_0 = arith.constant 0 : index
    %0 = vector.load %arg0[%c0, %c0_0] : memref<8x16xf32, #tpu.memory_space<vmem>>, vector<8x16xf32>
    %c0_1 = arith.constant 0 : index
    %c0_2 = arith.constant 0 : index
    %1 = vector.load %arg1[%c0_1, %c0_2] : memref<16x256xbf16, #tpu.memory_space<vmem>>, vector<16x256xbf16>
    %c0_3 = arith.constant 0 : index
    %c0_4 = arith.constant 0 : index
    %2 = vector.load %arg2[%c0_3, %c0_4] : memref<1x256xf32, #tpu.memory_space<vmem>>, vector<1x256xf32>
    %3 = vector.shape_cast %2 : vector<1x256xf32> to vector<1x256xf32>
    %4 = vector.broadcast %3 : vector<1x256xf32> to vector<8x256xf32>
    %c0_5 = arith.constant 0 : index
    %c0_6 = arith.constant 0 : index
    %c0_7 = arith.constant 0 : index
    %5 = vector.load %arg3[%c0_5, %c0_6, %c0_7] : memref<4x32x16xbf16, #tpu.memory_space<vmem>>, vector<1x32x16xbf16>
    %6 = vector.shape_cast %5 : vector<1x32x16xbf16> to vector<32x16xbf16>
    %c1 = arith.constant 1 : index
    %c0_8 = arith.constant 0 : index
    %c0_9 = arith.constant 0 : index
    %7 = vector.load %arg3[%c1, %c0_8, %c0_9] : memref<4x32x16xbf16, #tpu.memory_space<vmem>>, vector<1x32x16xbf16>
    %8 = vector.shape_cast %7 : vector<1x32x16xbf16> to vector<32x16xbf16>
    %c2 = arith.constant 2 : index
    %c0_10 = arith.constant 0 : index
    %c0_11 = arith.constant 0 : index
    %9 = vector.load %arg3[%c2, %c0_10, %c0_11] : memref<4x32x16xbf16, #tpu.memory_space<vmem>>, vector<1x32x16xbf16>
    %10 = vector.shape_cast %9 : vector<1x32x16xbf16> to vector<32x16xbf16>
    %c3 = arith.constant 3 : index
    %c0_12 = arith.constant 0 : index
    %c0_13 = arith.constant 0 : index
    %11 = vector.load %arg3[%c3, %c0_12, %c0_13] : memref<4x32x16xbf16, #tpu.memory_space<vmem>>, vector<1x32x16xbf16>
    %12 = vector.shape_cast %11 : vector<1x32x16xbf16> to vector<32x16xbf16>
    %c0_14 = arith.constant 0 : index
    %c0_15 = arith.constant 0 : index
    %c0_16 = arith.constant 0 : index
    %13 = vector.load %arg4[%c0_14, %c0_15, %c0_16] : memref<4x32x16xbf16, #tpu.memory_space<vmem>>, vector<1x32x16xbf16>
    %14 = vector.shape_cast %13 : vector<1x32x16xbf16> to vector<32x16xbf16>
    %c1_17 = arith.constant 1 : index
    %c0_18 = arith.constant 0 : index
    %c0_19 = arith.constant 0 : index
    %15 = vector.load %arg4[%c1_17, %c0_18, %c0_19] : memref<4x32x16xbf16, #tpu.memory_space<vmem>>, vector<1x32x16xbf16>
    %16 = vector.shape_cast %15 : vector<1x32x16xbf16> to vector<32x16xbf16>
    %c2_20 = arith.constant 2 : index
    %c0_21 = arith.constant 0 : index
    %c0_22 = arith.constant 0 : index
    %17 = vector.load %arg4[%c2_20, %c0_21, %c0_22] : memref<4x32x16xbf16, #tpu.memory_space<vmem>>, vector<1x32x16xbf16>
    %18 = vector.shape_cast %17 : vector<1x32x16xbf16> to vector<32x16xbf16>
    %c3_23 = arith.constant 3 : index
    %c0_24 = arith.constant 0 : index
    %c0_25 = arith.constant 0 : index
    %19 = vector.load %arg4[%c3_23, %c0_24, %c0_25] : memref<4x32x16xbf16, #tpu.memory_space<vmem>>, vector<1x32x16xbf16>
    %20 = vector.shape_cast %19 : vector<1x32x16xbf16> to vector<32x16xbf16>
    %c0_26 = arith.constant 0 : index
    %c0_27 = arith.constant 0 : index
    %c0_28 = arith.constant 0 : index
    %21 = vector.load %arg7[%c0_26, %c0_27, %c0_28] : memref<3x32x32xbf16, #tpu.memory_space<vmem>>, vector<1x32x32xbf16>
    %22 = vector.shape_cast %21 : vector<1x32x32xbf16> to vector<32x32xbf16>
    %c1_29 = arith.constant 1 : index
    %c0_30 = arith.constant 0 : index
    %c0_31 = arith.constant 0 : index
    %23 = vector.load %arg7[%c1_29, %c0_30, %c0_31] : memref<3x32x32xbf16, #tpu.memory_space<vmem>>, vector<1x32x32xbf16>
    %24 = vector.shape_cast %23 : vector<1x32x32xbf16> to vector<32x32xbf16>
    %c2_32 = arith.constant 2 : index
    %c0_33 = arith.constant 0 : index
    %c0_34 = arith.constant 0 : index
    %25 = vector.load %arg7[%c2_32, %c0_33, %c0_34] : memref<3x32x32xbf16, #tpu.memory_space<vmem>>, vector<1x32x32xbf16>
    %26 = vector.shape_cast %25 : vector<1x32x32xbf16> to vector<32x32xbf16>
    %c0_35 = arith.constant 0 : index
    %c0_36 = arith.constant 0 : index
    %c0_37 = arith.constant 0 : index
    %27 = vector.load %arg8[%c0_35, %c0_36, %c0_37] : memref<3x32x32xbf16, #tpu.memory_space<vmem>>, vector<1x32x32xbf16>
    %28 = vector.shape_cast %27 : vector<1x32x32xbf16> to vector<32x32xbf16>
    %c1_38 = arith.constant 1 : index
    %c0_39 = arith.constant 0 : index
    %c0_40 = arith.constant 0 : index
    %29 = vector.load %arg8[%c1_38, %c0_39, %c0_40] : memref<3x32x32xbf16, #tpu.memory_space<vmem>>, vector<1x32x32xbf16>
    %30 = vector.shape_cast %29 : vector<1x32x32xbf16> to vector<32x32xbf16>
    %c2_41 = arith.constant 2 : index
    %c0_42 = arith.constant 0 : index
    %c0_43 = arith.constant 0 : index
    %31 = vector.load %arg8[%c2_41, %c0_42, %c0_43] : memref<3x32x32xbf16, #tpu.memory_space<vmem>>, vector<1x32x32xbf16>
    %32 = vector.shape_cast %31 : vector<1x32x32xbf16> to vector<32x32xbf16>
    %c0_44 = arith.constant 0 : index
    %c0_45 = arith.constant 0 : index
    %33 = vector.load %arg5[%c0_44, %c0_45] : memref<1x16xf32, #tpu.memory_space<vmem>>, vector<1x16xf32>
    %34 = vector.shape_cast %33 : vector<1x16xf32> to vector<1x16xf32>
    %35 = vector.broadcast %34 : vector<1x16xf32> to vector<8x16xf32>
    %c0_46 = arith.constant 0 : index
    %c0_47 = arith.constant 0 : index
    %36 = vector.load %arg6[%c0_46, %c0_47] : memref<1x16xf32, #tpu.memory_space<vmem>>, vector<1x16xf32>
    %37 = vector.shape_cast %36 : vector<1x16xf32> to vector<1x16xf32>
    %38 = vector.broadcast %37 : vector<1x16xf32> to vector<8x16xf32>
    %c0_48 = arith.constant 0 : index
    %c0_49 = arith.constant 0 : index
    %39 = vector.load %arg9[%c0_48, %c0_49] : memref<1x32xf32, #tpu.memory_space<vmem>>, vector<1x32xf32>
    %40 = vector.shape_cast %39 : vector<1x32xf32> to vector<1x32xf32>
    %41 = vector.broadcast %40 : vector<1x32xf32> to vector<8x32xf32>
    %42 = arith.truncf %0 : vector<8x16xf32> to vector<8x16xbf16>
    %cst = arith.constant dense<0.000000e+00> : vector<8x256xf32>
    %43 = tpu.matmul %42, %1, %cst {dimension_numbers = #tpu.dot_dimension_numbers<[1], [0], [0], [1], [0, 0, 1, 1], [], []>} : vector<8x16xbf16>, vector<16x256xbf16>, vector<8x256xf32> -> vector<8x256xf32>
    %44 = arith.addf %43, %4 : vector<8x256xf32>
    %45 = vector.extract_strided_slice %44 {offsets = [0, 0], sizes = [8, 32], strides = [1, 1]} : vector<8x256xf32> to vector<8x32xf32>
    %46 = arith.mulf %45, %45 : vector<8x32xf32>
    %47 = vector.extract_strided_slice %44 {offsets = [0, 128], sizes = [8, 32], strides = [1, 1]} : vector<8x256xf32> to vector<8x32xf32>
    %48 = arith.addf %46, %47 : vector<8x32xf32>
    %cst_50 = arith.constant 0.000000e+00 : f32
    %49 = vector.broadcast %cst_50 : f32 to vector<8x32xf32>
    %50 = arith.cmpf ogt, %48, %49 : vector<8x32xf32>
    %cst_51 = arith.constant 1.000000e+00 : f32
    %cst_52 = arith.constant 2.000000e-01 : f32
    %51 = vector.broadcast %cst_51 : f32 to vector<8x32xf32>
    %52 = vector.broadcast %cst_52 : f32 to vector<8x32xf32>
    %53 = arith.select %50, %51, %52 : vector<8x32xi1>, vector<8x32xf32>
    %54 = arith.mulf %48, %53 : vector<8x32xf32>
    %55 = vector.extract_strided_slice %44 {offsets = [0, 32], sizes = [8, 32], strides = [1, 1]} : vector<8x256xf32> to vector<8x32xf32>
    %56 = arith.mulf %55, %55 : vector<8x32xf32>
    %57 = vector.extract_strided_slice %44 {offsets = [0, 160], sizes = [8, 32], strides = [1, 1]} : vector<8x256xf32> to vector<8x32xf32>
    %58 = arith.addf %56, %57 : vector<8x32xf32>
    %59 = arith.truncf %54 : vector<8x32xf32> to vector<8x32xbf16>
    %cst_53 = arith.constant dense<0.000000e+00> : vector<8x32xf32>
    %60 = tpu.matmul %59, %22, %cst_53 {dimension_numbers = #tpu.dot_dimension_numbers<[1], [0], [0], [1], [0, 0, 1, 1], [], []>} : vector<8x32xbf16>, vector<32x32xbf16>, vector<8x32xf32> -> vector<8x32xf32>
    %61 = arith.addf %58, %60 : vector<8x32xf32>
    %cst_54 = arith.constant 0.000000e+00 : f32
    %62 = vector.broadcast %cst_54 : f32 to vector<8x32xf32>
    %63 = arith.cmpf ogt, %61, %62 : vector<8x32xf32>
    %cst_55 = arith.constant 1.000000e+00 : f32
    %cst_56 = arith.constant 2.000000e-01 : f32
    %64 = vector.broadcast %cst_55 : f32 to vector<8x32xf32>
    %65 = vector.broadcast %cst_56 : f32 to vector<8x32xf32>
    %66 = arith.select %63, %64, %65 : vector<8x32xi1>, vector<8x32xf32>
    %67 = arith.mulf %61, %66 : vector<8x32xf32>
    %68 = vector.extract_strided_slice %44 {offsets = [0, 64], sizes = [8, 32], strides = [1, 1]} : vector<8x256xf32> to vector<8x32xf32>
    %69 = arith.mulf %68, %68 : vector<8x32xf32>
    %70 = vector.extract_strided_slice %44 {offsets = [0, 192], sizes = [8, 32], strides = [1, 1]} : vector<8x256xf32> to vector<8x32xf32>
    %71 = arith.addf %69, %70 : vector<8x32xf32>
    %72 = arith.truncf %67 : vector<8x32xf32> to vector<8x32xbf16>
    %cst_57 = arith.constant dense<0.000000e+00> : vector<8x32xf32>
    %73 = tpu.matmul %72, %24, %cst_57 {dimension_numbers = #tpu.dot_dimension_numbers<[1], [0], [0], [1], [0, 0, 1, 1], [], []>} : vector<8x32xbf16>, vector<32x32xbf16>, vector<8x32xf32> -> vector<8x32xf32>
    %74 = arith.addf %71, %73 : vector<8x32xf32>
    %cst_58 = arith.constant 0.000000e+00 : f32
    %75 = vector.broadcast %cst_58 : f32 to vector<8x32xf32>
    %76 = arith.cmpf ogt, %74, %75 : vector<8x32xf32>
    %cst_59 = arith.constant 1.000000e+00 : f32
    %cst_60 = arith.constant 2.000000e-01 : f32
    %77 = vector.broadcast %cst_59 : f32 to vector<8x32xf32>
    %78 = vector.broadcast %cst_60 : f32 to vector<8x32xf32>
    %79 = arith.select %76, %77, %78 : vector<8x32xi1>, vector<8x32xf32>
    %80 = arith.mulf %74, %79 : vector<8x32xf32>
    %81 = vector.extract_strided_slice %44 {offsets = [0, 96], sizes = [8, 32], strides = [1, 1]} : vector<8x256xf32> to vector<8x32xf32>
    %82 = arith.mulf %81, %81 : vector<8x32xf32>
    %83 = vector.extract_strided_slice %44 {offsets = [0, 224], sizes = [8, 32], strides = [1, 1]} : vector<8x256xf32> to vector<8x32xf32>
    %84 = arith.addf %82, %83 : vector<8x32xf32>
    %85 = arith.truncf %80 : vector<8x32xf32> to vector<8x32xbf16>
    %cst_61 = arith.constant dense<0.000000e+00> : vector<8x32xf32>
    %86 = tpu.matmul %85, %26, %cst_61 {dimension_numbers = #tpu.dot_dimension_numbers<[1], [0], [0], [1], [0, 0, 1, 1], [], []>} : vector<8x32xbf16>, vector<32x32xbf16>, vector<8x32xf32> -> vector<8x32xf32>
    %87 = arith.addf %84, %86 : vector<8x32xf32>
    %cst_62 = arith.constant 0.000000e+00 : f32
    %88 = vector.broadcast %cst_62 : f32 to vector<8x32xf32>
    %89 = arith.cmpf ogt, %87, %88 : vector<8x32xf32>
    %cst_63 = arith.constant 1.000000e+00 : f32
    %cst_64 = arith.constant 2.000000e-01 : f32
    %90 = vector.broadcast %cst_63 : f32 to vector<8x32xf32>
    %91 = vector.broadcast %cst_64 : f32 to vector<8x32xf32>
    %92 = arith.select %89, %90, %91 : vector<8x32xi1>, vector<8x32xf32>
    %93 = arith.mulf %0, %35 : vector<8x16xf32>
    %cst_65 = arith.constant dense<0.000000e+00> : vector<8xf32>
    %94 = vector.multi_reduction <add>, %93, %cst_65 [1] : vector<8x16xf32> to vector<8xf32>
    %95 = vector.shape_cast %94 : vector<8xf32> to vector<8x1xf32>
    %cst_66 = arith.constant 2.000000e+00 : f32
    %96 = vector.broadcast %cst_66 : f32 to vector<8x1xf32>
    %97 = arith.mulf %96, %95 : vector<8x1xf32>
    %98 = vector.broadcast %97 : vector<8x1xf32> to vector<8x16xf32>
    %99 = arith.mulf %98, %35 : vector<8x16xf32>
    %100 = arith.addf %99, %38 : vector<8x16xf32>
    %101 = arith.mulf %41, %92 : vector<8x32xf32>
    %102 = arith.truncf %101 : vector<8x32xf32> to vector<8x32xbf16>
    %cst_67 = arith.constant 2.000000e+00 : f32
    %103 = vector.broadcast %cst_67 : f32 to vector<8x32xf32>
    %104 = arith.mulf %103, %81 : vector<8x32xf32>
    %105 = arith.mulf %101, %104 : vector<8x32xf32>
    %106 = arith.truncf %105 : vector<8x32xf32> to vector<8x32xbf16>
    %cst_68 = arith.constant dense<0.000000e+00> : vector<8x16xf32>
    %107 = tpu.matmul %106, %12, %cst_68 {dimension_numbers = #tpu.dot_dimension_numbers<[1], [0], [0], [1], [0, 0, 1, 1], [], []>} : vector<8x32xbf16>, vector<32x16xbf16>, vector<8x16xf32> -> vector<8x16xf32>
    %108 = arith.addf %100, %107 : vector<8x16xf32>
    %cst_69 = arith.constant dense<0.000000e+00> : vector<8x16xf32>
    %109 = tpu.matmul %102, %20, %cst_69 {dimension_numbers = #tpu.dot_dimension_numbers<[1], [0], [0], [1], [0, 0, 1, 1], [], []>} : vector<8x32xbf16>, vector<32x16xbf16>, vector<8x16xf32> -> vector<8x16xf32>
    %110 = arith.addf %108, %109 : vector<8x16xf32>
    %cst_70 = arith.constant dense<0.000000e+00> : vector<8x32xf32>
    %111 = tpu.matmul %102, %32, %cst_70 {dimension_numbers = #tpu.dot_dimension_numbers<[1], [0], [0], [1], [0, 0, 1, 1], [], []>} : vector<8x32xbf16>, vector<32x32xbf16>, vector<8x32xf32> -> vector<8x32xf32>
    %112 = arith.mulf %111, %79 : vector<8x32xf32>
    %113 = arith.truncf %112 : vector<8x32xf32> to vector<8x32xbf16>
    %cst_71 = arith.constant 2.000000e+00 : f32
    %114 = vector.broadcast %cst_71 : f32 to vector<8x32xf32>
    %115 = arith.mulf %114, %68 : vector<8x32xf32>
    %116 = arith.mulf %112, %115 : vector<8x32xf32>
    %117 = arith.truncf %116 : vector<8x32xf32> to vector<8x32xbf16>
    %cst_72 = arith.constant dense<0.000000e+00> : vector<8x16xf32>
    %118 = tpu.matmul %117, %10, %cst_72 {dimension_numbers = #tpu.dot_dimension_numbers<[1], [0], [0], [1], [0, 0, 1, 1], [], []>} : vector<8x32xbf16>, vector<32x16xbf16>, vector<8x16xf32> -> vector<8x16xf32>
    %119 = arith.addf %110, %118 : vector<8x16xf32>
    %cst_73 = arith.constant dense<0.000000e+00> : vector<8x16xf32>
    %120 = tpu.matmul %113, %18, %cst_73 {dimension_numbers = #tpu.dot_dimension_numbers<[1], [0], [0], [1], [0, 0, 1, 1], [], []>} : vector<8x32xbf16>, vector<32x16xbf16>, vector<8x16xf32> -> vector<8x16xf32>
    %121 = arith.addf %119, %120 : vector<8x16xf32>
    %cst_74 = arith.constant dense<0.000000e+00> : vector<8x32xf32>
    %122 = tpu.matmul %113, %30, %cst_74 {dimension_numbers = #tpu.dot_dimension_numbers<[1], [0], [0], [1], [0, 0, 1, 1], [], []>} : vector<8x32xbf16>, vector<32x32xbf16>, vector<8x32xf32> -> vector<8x32xf32>
    %123 = arith.mulf %122, %66 : vector<8x32xf32>
    %124 = arith.truncf %123 : vector<8x32xf32> to vector<8x32xbf16>
    %cst_75 = arith.constant 2.000000e+00 : f32
    %125 = vector.broadcast %cst_75 : f32 to vector<8x32xf32>
    %126 = arith.mulf %125, %55 : vector<8x32xf32>
    %127 = arith.mulf %123, %126 : vector<8x32xf32>
    %128 = arith.truncf %127 : vector<8x32xf32> to vector<8x32xbf16>
    %cst_76 = arith.constant dense<0.000000e+00> : vector<8x16xf32>
    %129 = tpu.matmul %128, %8, %cst_76 {dimension_numbers = #tpu.dot_dimension_numbers<[1], [0], [0], [1], [0, 0, 1, 1], [], []>} : vector<8x32xbf16>, vector<32x16xbf16>, vector<8x16xf32> -> vector<8x16xf32>
    %130 = arith.addf %121, %129 : vector<8x16xf32>
    %cst_77 = arith.constant dense<0.000000e+00> : vector<8x16xf32>
    %131 = tpu.matmul %124, %16, %cst_77 {dimension_numbers = #tpu.dot_dimension_numbers<[1], [0], [0], [1], [0, 0, 1, 1], [], []>} : vector<8x32xbf16>, vector<32x16xbf16>, vector<8x16xf32> -> vector<8x16xf32>
    %132 = arith.addf %130, %131 : vector<8x16xf32>
    %cst_78 = arith.constant dense<0.000000e+00> : vector<8x32xf32>
    %133 = tpu.matmul %124, %28, %cst_78 {dimension_numbers = #tpu.dot_dimension_numbers<[1], [0], [0], [1], [0, 0, 1, 1], [], []>} : vector<8x32xbf16>, vector<32x32xbf16>, vector<8x32xf32> -> vector<8x32xf32>
    %134 = arith.mulf %133, %53 : vector<8x32xf32>
    %135 = arith.truncf %134 : vector<8x32xf32> to vector<8x32xbf16>
    %cst_79 = arith.constant 2.000000e+00 : f32
    %136 = vector.broadcast %cst_79 : f32 to vector<8x32xf32>
    %137 = arith.mulf %136, %45 : vector<8x32xf32>
    %138 = arith.mulf %134, %137 : vector<8x32xf32>
    %139 = arith.truncf %138 : vector<8x32xf32> to vector<8x32xbf16>
    %cst_80 = arith.constant dense<0.000000e+00> : vector<8x16xf32>
    %140 = tpu.matmul %139, %6, %cst_80 {dimension_numbers = #tpu.dot_dimension_numbers<[1], [0], [0], [1], [0, 0, 1, 1], [], []>} : vector<8x32xbf16>, vector<32x16xbf16>, vector<8x16xf32> -> vector<8x16xf32>
    %141 = arith.addf %132, %140 : vector<8x16xf32>
    %cst_81 = arith.constant dense<0.000000e+00> : vector<8x16xf32>
    %142 = tpu.matmul %135, %14, %cst_81 {dimension_numbers = #tpu.dot_dimension_numbers<[1], [0], [0], [1], [0, 0, 1, 1], [], []>} : vector<8x32xbf16>, vector<32x16xbf16>, vector<8x16xf32> -> vector<8x16xf32>
    %143 = arith.addf %141, %142 : vector<8x16xf32>
    %cst_82 = arith.constant 5.000000e-01 : f32
    %144 = vector.broadcast %cst_82 : f32 to vector<8x16xf32>
    %145 = arith.mulf %144, %143 : vector<8x16xf32>
    %cst_83 = arith.constant 5.000000e-01 : f32
    %146 = vector.broadcast %cst_83 : f32 to vector<8x16xf32>
    %147 = arith.mulf %146, %0 : vector<8x16xf32>
    %148 = arith.addf %145, %147 : vector<8x16xf32>
    %c0_84 = arith.constant 0 : index
    %c0_85 = arith.constant 0 : index
    %149 = vector.load %arg10[%c0_84, %c0_85] : memref<8x16xf32, #tpu.memory_space<vmem>>, vector<8x16xf32>
    tpu.vector_store %arg10[%c0_84, %c0_85], %148 {strides = array<i32>} : memref<8x16xf32, #tpu.memory_space<vmem>>, vector<8x16xf32>,
    return
  }
}

</mosaic_0001>

<llo_original>
// kernel: tpu_custom_call.1
$region0: #{tpu_custom_call.1}
  #allocation0 [shape = 'u32[]', space=smem, size = 0x4, offset = 0x4, fixed_abs, tag = 'smem constant byte address 0x4 - core index']
  #allocation1 [shape = 'u32[144,128]{1,0:T(1,128)}', space=vmem, size = 0x12000, scoped, tag = 'internal scratch']
  %s0 = inlined_call_operand.vmem [shape: f32[8,16], index: 0, kind: input, shape index: {}]
  %s1 = inlined_call_operand.vmem [shape: bf16[16,256], index: 1, kind: input, shape index: {}]
  %s2 = inlined_call_operand.vmem [shape: f32[1,256], index: 2, kind: input, shape index: {}]
  %s3 = inlined_call_operand.vmem [shape: bf16[4,32,16], index: 3, kind: input, shape index: {}]
  %s4 = inlined_call_operand.vmem [shape: bf16[4,32,16], index: 4, kind: input, shape index: {}]
  %s5 = inlined_call_operand.vmem [shape: f32[1,16], index: 5, kind: input, shape index: {}]
  %s6 = inlined_call_operand.vmem [shape: f32[1,16], index: 6, kind: input, shape index: {}]
  %s7 = inlined_call_operand.vmem [shape: bf16[3,32,32], index: 7, kind: input, shape index: {}]
  %s8 = inlined_call_operand.vmem [shape: bf16[3,32,32], index: 8, kind: input, shape index: {}]
  %s9 = inlined_call_operand.vmem [shape: f32[1,32], index: 9, kind: input, shape index: {}]
  %s10 = inlined_call_operand.hbm [shape: f32[8,16], index: 10, kind: output, shape index: {}]
  %s11 = sld [smem:[#allocation0]]
  $region50: #{tpu_custom_call.1} parent=0
    _
  %s13 = ssub.s32 1, %s11
  %s14 = scalar_select 0, %s13, %s11
  $region1: #{tpu_custom_call.1} parent=0
    #allocation2 [shape = 'u8[4096]{0}', space=vmem, size = 0x1000, scoped, tag = 'output window, operand 0, single buffered']
    #allocation3 [shape = 's32[1]{0}', space=sflag, size = 0x4, scoped, tag = 'scoped memory for tpu_custom_call.1']
    %15 = vsyncpa [#allocation3], 0
    // Predicated region
    $region2: #{tpu_custom_call.1} parent=1 // pred_check
      _
    $region3: #{tpu_custom_call.1} parent=1 // pred_check_branch
      %17 = sbr.rel (0) target = $region5
    $region4: #{tpu_custom_call.1} parent=1 // pred_region
      _
    $region5: #{tpu_custom_call.1} parent=1 // pred_fallthru
      _
    // Predicated region
    $region6: #{tpu_custom_call.1} parent=1 // pred_check
      _
    $region7: #{tpu_custom_call.1} parent=1 // pred_check_branch
      %19 = sbr.rel (0) target = $region9
    $region8: #{tpu_custom_call.1} parent=1 // pred_region
      _
    $region9: #{tpu_custom_call.1} parent=1 // pred_fallthru
      _
    // Predicated region
    $region10: #{tpu_custom_call.1} parent=1 // pred_check
      _
    $region11: #{tpu_custom_call.1} parent=1 // pred_check_branch
      %21 = sbr.rel (0) target = $region13
    $region12: #{tpu_custom_call.1} parent=1 // pred_region
      _
    $region13: #{tpu_custom_call.1} parent=1 // pred_fallthru
      _
    // Predicated region
    $region14: #{tpu_custom_call.1} parent=1 // pred_check
      _
    $region15: #{tpu_custom_call.1} parent=1 // pred_check_branch
      %23 = sbr.rel (0) target = $region17
    $region16: #{tpu_custom_call.1} parent=1 // pred_region
      _
    $region17: #{tpu_custom_call.1} parent=1 // pred_fallthru
      _
    // Predicated region
    $region18: #{tpu_custom_call.1} parent=1 // pred_check
      _
    $region19: #{tpu_custom_call.1} parent=1 // pred_check_branch
      %25 = sbr.rel (0) target = $region21
    $region20: #{tpu_custom_call.1} parent=1 // pred_region
      _
    $region21: #{tpu_custom_call.1} parent=1 // pred_fallthru
      _
    // Predicated region
    $region22: #{tpu_custom_call.1} parent=1 // pred_check
      _
    $region23: #{tpu_custom_call.1} parent=1 // pred_check_branch
      %27 = sbr.rel (0) target = $region25
    $region24: #{tpu_custom_call.1} parent=1 // pred_region
      _
    $region25: #{tpu_custom_call.1} parent=1 // pred_fallthru
      _
    // Predicated region
    $region26: #{tpu_custom_call.1} parent=1 // pred_check
      _
    $region27: #{tpu_custom_call.1} parent=1 // pred_check_branch
      %29 = sbr.rel (0) target = $region29
    $region28: #{tpu_custom_call.1} parent=1 // pred_region
      _
    $region29: #{tpu_custom_call.1} parent=1 // pred_fallthru
      _
    // Predicated region
    $region30: #{tpu_custom_call.1} parent=1 // pred_check
      _
    $region31: #{tpu_custom_call.1} parent=1 // pred_check_branch
      %31 = sbr.rel (0) target = $region33
    $region32: #{tpu_custom_call.1} parent=1 // pred_region
      _
    $region33: #{tpu_custom_call.1} parent=1 // pred_fallthru
      _
    // Predicated region
    $region34: #{tpu_custom_call.1} parent=1 // pred_check
      _
    $region35: #{tpu_custom_call.1} parent=1 // pred_check_branch
      %33 = sbr.rel (0) target = $region37
    $region36: #{tpu_custom_call.1} parent=1 // pred_region
      _
    $region37: #{tpu_custom_call.1} parent=1 // pred_fallthru
      _
    // Predicated region
    $region38: #{tpu_custom_call.1} parent=1 // pred_check
      _
    $region39: #{tpu_custom_call.1} parent=1 // pred_check_branch
      %35 = sbr.rel (0) target = $region41
    $region40: #{tpu_custom_call.1} parent=1 // pred_region
      _
    $region41: #{tpu_custom_call.1} parent=1 // pred_fallthru
      _
    %v37 = vld [vmem:[%s0] sm:$0xff]
    %v38 = vld [vmem:[%s1] sm:$0xff]
    %v39 = vld [vmem:[%s1 + $0x8] sm:$0xff]
    %v40 = vld [vmem:[%s2] sm:$0x3]
    %v42 = vlaneseq
    %v43 = vshrl.u32 %v42, 7
    %v44 = vsub.s32 0, %v43
    %v45 = vrot.slane %v40, %v44
    %v46 = vlaneseq
    %v47 = vshrl.u32 %v46, 7
    %v48 = vsub.s32 1, %v47
    %v49 = vrot.slane %v40, %v48
    %v52 = vld [vmem:[%s3] sm:$0xf]
    %v53 = vld [vmem:[%s3 + $0x4] sm:$0xf]
    %v54 = vld [vmem:[%s3 + $0x8] sm:$0xf]
    %v55 = vld [vmem:[%s3 + $0xc] sm:$0xf]
    %s56 = scalar_lea.vmem %s3, 16
    %v57 = vld [vmem:[%s56] sm:$0xf]
    %v58 = vld [vmem:[%s56 + $0x4] sm:$0xf]
    %v59 = vld [vmem:[%s56 + $0x8] sm:$0xf]
    %v60 = vld [vmem:[%s56 + $0xc] sm:$0xf]
    %s61 = scalar_lea.vmem %s3, 32
    %v62 = vld [vmem:[%s61] sm:$0xf]
    %v63 = vld [vmem:[%s61 + $0x4] sm:$0xf]
    %v64 = vld [vmem:[%s61 + $0x8] sm:$0xf]
    %v65 = vld [vmem:[%s61 + $0xc] sm:$0xf]
    %s66 = scalar_lea.vmem %s3, 48
    %v67 = vld [vmem:[%s66] sm:$0xf]
    %v68 = vld [vmem:[%s66 + $0x4] sm:$0xf]
    %v69 = vld [vmem:[%s66 + $0x8] sm:$0xf]
    %v70 = vld [vmem:[%s66 + $0xc] sm:$0xf]
    %v71 = vld [vmem:[%s4] sm:$0xf]
    %v72 = vld [vmem:[%s4 + $0x4] sm:$0xf]
    %v73 = vld [vmem:[%s4 + $0x8] sm:$0xf]
    %v74 = vld [vmem:[%s4 + $0xc] sm:$0xf]
    %s75 = scalar_lea.vmem %s4, 16
    %v76 = vld [vmem:[%s75] sm:$0xf]
    %v77 = vld [vmem:[%s75 + $0x4] sm:$0xf]
    %v78 = vld [vmem:[%s75 + $0x8] sm:$0xf]
    %v79 = vld [vmem:[%s75 + $0xc] sm:$0xf]
    %s80 = scalar_lea.vmem %s4, 32
    %v81 = vld [vmem:[%s80] sm:$0xf]
    %v82 = vld [vmem:[%s80 + $0x4] sm:$0xf]
    %v83 = vld [vmem:[%s80 + $0x8] sm:$0xf]
    %v84 = vld [vmem:[%s80 + $0xc] sm:$0xf]
    %s85 = scalar_lea.vmem %s4, 48
    %v86 = vld [vmem:[%s85] sm:$0xf]
    %v87 = vld [vmem:[%s85 + $0x4] sm:$0xf]
    %v88 = vld [vmem:[%s85 + $0x8] sm:$0xf]
    %v89 = vld [vmem:[%s85 + $0xc] sm:$0xf]
    %v90 = vld [vmem:[%s7] sm:$0xf]
    %v91 = vld [vmem:[%s7 + $0x4] sm:$0xf]
    %v92 = vld [vmem:[%s7 + $0x8] sm:$0xf]
    %v93 = vld [vmem:[%s7 + $0xc] sm:$0xf]
    %s94 = scalar_lea.vmem %s7, 16
    %v95 = vld [vmem:[%s94] sm:$0xf]
    %v96 = vld [vmem:[%s94 + $0x4] sm:$0xf]
    %v97 = vld [vmem:[%s94 + $0x8] sm:$0xf]
    %v98 = vld [vmem:[%s94 + $0xc] sm:$0xf]
    %s99 = scalar_lea.vmem %s7, 32
    %v100 = vld [vmem:[%s99] sm:$0xf]
    %v101 = vld [vmem:[%s99 + $0x4] sm:$0xf]
    %v102 = vld [vmem:[%s99 + $0x8] sm:$0xf]
    %v103 = vld [vmem:[%s99 + $0xc] sm:$0xf]
    %v104 = vld [vmem:[%s8] sm:$0xf]
    %v105 = vld [vmem:[%s8 + $0x4] sm:$0xf]
    %v106 = vld [vmem:[%s8 + $0x8] sm:$0xf]
    %v107 = vld [vmem:[%s8 + $0xc] sm:$0xf]
    %s108 = scalar_lea.vmem %s8, 16
    %v109 = vld [vmem:[%s108] sm:$0xf]
    %v110 = vld [vmem:[%s108 + $0x4] sm:$0xf]
    %v111 = vld [vmem:[%s108 + $0x8] sm:$0xf]
    %v112 = vld [vmem:[%s108 + $0xc] sm:$0xf]
    %s113 = scalar_lea.vmem %s8, 32
    %v114 = vld [vmem:[%s113] sm:$0xf]
    %v115 = vld [vmem:[%s113 + $0x4] sm:$0xf]
    %v116 = vld [vmem:[%s113 + $0x8] sm:$0xf]
    %v117 = vld [vmem:[%s113 + $0xc] sm:$0xf]
    %v118 = vld [vmem:[%s5] sm:$0x1]
    %v120 = vlaneseq
    %v121 = vshrl.u32 %v120, 7
    %v122 = vsub.s32 0, %v121
    %v123 = vrot.slane %v118, %v122
    %v125 = vld [vmem:[%s6] sm:$0x1]
    %v127 = vlaneseq
    %v128 = vshrl.u32 %v127, 7
    %v129 = vsub.s32 0, %v128
    %v130 = vrot.slane %v125, %v129
    %v132 = vld [vmem:[%s9] sm:$0x1]
    %v134 = vlaneseq
    %v135 = vshrl.u32 %v134, 7
    %v136 = vsub.s32 0, %v135
    %v137 = vrot.slane %v132, %v136
    %v139 = vpack.c.bf16 %v37, %v37
    %v142 = vunpack.c.l.b16 %v38
    %v143 = vunpack.c.h.b16 %v38
    %v144 = vunpack.c.l.b16 %v39
    %v145 = vunpack.c.h.b16 %v39
    %v146 = vpack.c.b16 %v144, %v142
    %v147 = vpack.c.b16 %v145, %v143
    %vm150 = vcmask 130048
    %v152 = vsel %vm150, %v139, 0
    %154 = vmatprep.subr.bf16.mxu0 %v147
    %155 = vmatpush1.bf16.msra.mxu0 %v146
    %156 = vmatprep.subr.bf16.mxu0 0
    %157 = vmatpush1.bf16.msra.mxu0 0
    %158 = vmatprep.subr.bf16.mxu0 0
    %159 = vmatpush1.bf16.msra.mxu0 0
    %160 = vmatprep.subr.bf16.mxu0 0
    %161 = vmatpush1.bf16.msra.mxu0 0
    %162 = vmatprep.subr.bf16.mxu0 0
    %163 = vmatpush1.bf16.msra.mxu0 0
    %164 = vmatprep.subr.bf16.mxu0 0
    %165 = vmatpush1.bf16.msra.mxu0 0
    %166 = vmatprep.subr.bf16.mxu0 0
    %167 = vmatpush1.bf16.msra.mxu0 0
    %168 = vmatprep.subr.bf16.mxu0 0
    %169 = vmatpush1.bf16.msra.mxu0 0
    %170 = vmatprep.subr.bf16.mxu0 0
    %171 = vmatpush1.bf16.msra.mxu0 0
    %172 = vmatprep.subr.bf16.mxu0 0
    %173 = vmatpush1.bf16.msra.mxu0 0
    %174 = vmatprep.subr.bf16.mxu0 0
    %175 = vmatpush1.bf16.msra.mxu0 0
    %176 = vmatprep.subr.bf16.mxu0 0
    %177 = vmatpush1.bf16.msra.mxu0 0
    %178 = vmatprep.subr.bf16.mxu0 0
    %179 = vmatpush1.bf16.msra.mxu0 0
    %180 = vmatprep.subr.bf16.mxu0 0
    %181 = vmatpush1.bf16.msra.mxu0 0
    %182 = vmatprep.subr.bf16.mxu0 0
    %183 = vmatpush1.bf16.msra.mxu0 0
    %184 = vmatprep.subr.bf16.mxu0 0
    %185 = vmatpush1.bf16.msra.mxu0 0
    %186 = vmatprep.mubr.bf16.mxu0 0
    %187 = vmatmul.mubr.bf16.gmra.mrb[0].mxu0 %v152
    %v188 = vpop.f32.mrb[0].mxu0
    %v189 = vadd.f32 %v45, %v188
    %v190 = vpop.f32.mrb[0].mxu0
    %v191 = vadd.f32 %v49, %v190
    %v192 = vpop.f32.mrb[0].mxu0
    %v193 = vpop.f32.mrb[0].mxu0
    %194 = vdwg.mxu0
    %v195 = vmul.f32 %v189, %v189
    %v196 = vadd.f32 %v195, %v191
    %vm197 = vcmp.gt.f32.partialorder %v196, 0.0
    %v198 = vsel %vm197, 1.0, 0.2
    %v199 = vmul.f32 %v196, %v198
    %v200 = vpack.c.bf16 %v199, %v199
    %v205 = vunpack.c.l.b16 %v90
    %v206 = vunpack.c.l.b16 %v91
    %v207 = vunpack.c.l.b16 %v92
    %v208 = vunpack.c.l.b16 %v93
    %v209 = vpack.c.b16 %v206, %v205
    %v210 = vpack.c.b16 %v208, %v207
    %vm213 = vcmask 261120
    %v215 = vsel %vm213, %v200, 0
    %217 = vmatprep.subr.bf16.mxu0 0
    %218 = vmatpush1.bf16.msra.mxu0 %v209
    %219 = vmatprep.subr.bf16.mxu0 0
    %220 = vmatpush1.bf16.msra.mxu0 %v210
    %221 = vmatprep.subr.bf16.mxu0 0
    %222 = vmatpush1.bf16.msra.mxu0 0
    %223 = vmatprep.subr.bf16.mxu0 0
    %224 = vmatpush1.bf16.msra.mxu0 0
    %225 = vmatprep.subr.bf16.mxu0 0
    %226 = vmatpush1.bf16.msra.mxu0 0
    %227 = vmatprep.subr.bf16.mxu0 0
    %228 = vmatpush1.bf16.msra.mxu0 0
    %229 = vmatprep.subr.bf16.mxu0 0
    %230 = vmatpush1.bf16.msra.mxu0 0
    %231 = vmatprep.subr.bf16.mxu0 0
    %232 = vmatpush1.bf16.msra.mxu0 0
    %233 = vmatprep.subr.bf16.mxu0 0
    %234 = vmatpush1.bf16.msra.mxu0 0
    %235 = vmatprep.subr.bf16.mxu0 0
    %236 = vmatpush1.bf16.msra.mxu0 0
    %237 = vmatprep.subr.bf16.mxu0 0
    %238 = vmatpush1.bf16.msra.mxu0 0
    %239 = vmatprep.subr.bf16.mxu0 0
    %240 = vmatpush1.bf16.msra.mxu0 0
    %241 = vmatprep.subr.bf16.mxu0 0
    %242 = vmatpush1.bf16.msra.mxu0 0
    %243 = vmatprep.subr.bf16.mxu0 0
    %244 = vmatpush1.bf16.msra.mxu0 0
    %245 = vmatprep.subr.bf16.mxu0 0
    %246 = vmatpush1.bf16.msra.mxu0 0
    %247 = vmatprep.subr.bf16.mxu0 0
    %248 = vmatpush1.bf16.msra.mxu0 0
    %249 = vmatprep.mubr.bf16.mxu0 0
    %250 = vmatmul.mubr.bf16.gmra.mrb[0].mxu0 %v215
    %v251 = vpop.f32.mrb[0].mxu0
    %v252 = vadd.f32 0.0, %v251
    %v253 = vpop.f32.mrb[0].mxu0
    %v254 = vpop.f32.mrb[0].mxu0
    %v255 = vpop.f32.mrb[0].mxu0
    %256 = vdwg.mxu0
    %258 = vrot.lane.b32.xlu0 %v252, 32
    %v259 = vpop.permute.xlu0 %258
    %v261 = vadd.f32 %v196, %v259
    %vm262 = vcmp.gt.f32.partialorder %v261, 0.0
    %v263 = vsel %vm262, 1.0, 0.2
    %v264 = vmul.f32 %v261, %v263
    %v265 = vpack.c.bf16 %v264, %v264
    %267 = vrot.lane.b32.xlu0 %v265, 96
    %v268 = vpop.permute.xlu0 %267
    %v273 = vunpack.c.l.b16 %v95
    %v274 = vunpack.c.l.b16 %v96
    %v275 = vunpack.c.l.b16 %v97
    %v276 = vunpack.c.l.b16 %v98
    %v277 = vpack.c.b16 %v274, %v273
    %v278 = vpack.c.b16 %v276, %v275
    %v282 = vsel %vm213, %v268, 0
    %284 = vmatprep.subr.bf16.mxu0 0
    %285 = vmatpush1.bf16.msra.mxu0 %v277
    %286 = vmatprep.subr.bf16.mxu0 0
    %287 = vmatpush1.bf16.msra.mxu0 %v278
    %288 = vmatprep.subr.bf16.mxu0 0
    %289 = vmatpush1.bf16.msra.mxu0 0
    %290 = vmatprep.subr.bf16.mxu0 0
    %291 = vmatpush1.bf16.msra.mxu0 0
    %292 = vmatprep.subr.bf16.mxu0 0
    %293 = vmatpush1.bf16.msra.mxu0 0
    %294 = vmatprep.subr.bf16.mxu0 0
    %295 = vmatpush1.bf16.msra.mxu0 0
    %296 = vmatprep.subr.bf16.mxu0 0
    %297 = vmatpush1.bf16.msra.mxu0 0
    %298 = vmatprep.subr.bf16.mxu0 0
    %299 = vmatpush1.bf16.msra.mxu0 0
    %300 = vmatprep.subr.bf16.mxu0 0
    %301 = vmatpush1.bf16.msra.mxu0 0
    %302 = vmatprep.subr.bf16.mxu0 0
    %303 = vmatpush1.bf16.msra.mxu0 0
    %304 = vmatprep.subr.bf16.mxu0 0
    %305 = vmatpush1.bf16.msra.mxu0 0
    %306 = vmatprep.subr.bf16.mxu0 0
    %307 = vmatpush1.bf16.msra.mxu0 0
    %308 = vmatprep.subr.bf16.mxu0 0
    %309 = vmatpush1.bf16.msra.mxu0 0
    %310 = vmatprep.subr.bf16.mxu0 0
    %311 = vmatpush1.bf16.msra.mxu0 0
    %312 = vmatprep.subr.bf16.mxu0 0
    %313 = vmatpush1.bf16.msra.mxu0 0
    %314 = vmatprep.subr.bf16.mxu0 0
    %315 = vmatpush1.bf16.msra.mxu0 0
    %316 = vmatprep.mubr.bf16.mxu0 0
    %317 = vmatmul.mubr.bf16.gmra.mrb[0].mxu0 %v282
    %v318 = vpop.f32.mrb[0].mxu0
    %v319 = vadd.f32 0.0, %v318
    %v320 = vpop.f32.mrb[0].mxu0
    %v321 = vpop.f32.mrb[0].mxu0
    %v322 = vpop.f32.mrb[0].mxu0
    %323 = vdwg.mxu0
    %325 = vrot.lane.b32.xlu0 %v319, 64
    %v326 = vpop.permute.xlu0 %325
    %v328 = vadd.f32 %v196, %v326
    %vm329 = vcmp.gt.f32.partialorder %v328, 0.0
    %v330 = vsel %vm329, 1.0, 0.2
    %v331 = vmul.f32 %v328, %v330
    %v332 = vpack.c.bf16 %v331, %v331
    %334 = vrot.lane.b32.xlu0 %v332, 64
    %v335 = vpop.permute.xlu0 %334
    %v340 = vunpack.c.l.b16 %v100
    %v341 = vunpack.c.l.b16 %v101
    %v342 = vunpack.c.l.b16 %v102
    %v343 = vunpack.c.l.b16 %v103
    %v344 = vpack.c.b16 %v341, %v340
    %v345 = vpack.c.b16 %v343, %v342
    %v349 = vsel %vm213, %v335, 0
    %351 = vmatprep.subr.bf16.mxu0 0
    %352 = vmatpush1.bf16.msra.mxu0 %v344
    %353 = vmatprep.subr.bf16.mxu0 0
    %354 = vmatpush1.bf16.msra.mxu0 %v345
    %355 = vmatprep.subr.bf16.mxu0 0
    %356 = vmatpush1.bf16.msra.mxu0 0
    %357 = vmatprep.subr.bf16.mxu0 0
    %358 = vmatpush1.bf16.msra.mxu0 0
    %359 = vmatprep.subr.bf16.mxu0 0
    %360 = vmatpush1.bf16.msra.mxu0 0
    %361 = vmatprep.subr.bf16.mxu0 0
    %362 = vmatpush1.bf16.msra.mxu0 0
    %363 = vmatprep.subr.bf16.mxu0 0
    %364 = vmatpush1.bf16.msra.mxu0 0
    %365 = vmatprep.subr.bf16.mxu0 0
    %366 = vmatpush1.bf16.msra.mxu0 0
    %367 = vmatprep.subr.bf16.mxu0 0
    %368 = vmatpush1.bf16.msra.mxu0 0
    %369 = vmatprep.subr.bf16.mxu0 0
    %370 = vmatpush1.bf16.msra.mxu0 0
    %371 = vmatprep.subr.bf16.mxu0 0
    %372 = vmatpush1.bf16.msra.mxu0 0
    %373 = vmatprep.subr.bf16.mxu0 0
    %374 = vmatpush1.bf16.msra.mxu0 0
    %375 = vmatprep.subr.bf16.mxu0 0
    %376 = vmatpush1.bf16.msra.mxu0 0
    %377 = vmatprep.subr.bf16.mxu0 0
    %378 = vmatpush1.bf16.msra.mxu0 0
    %379 = vmatprep.subr.bf16.mxu0 0
    %380 = vmatpush1.bf16.msra.mxu0 0
    %381 = vmatprep.subr.bf16.mxu0 0
    %382 = vmatpush1.bf16.msra.mxu0 0
    %383 = vmatprep.mubr.bf16.mxu0 0
    %384 = vmatmul.mubr.bf16.gmra.mrb[0].mxu0 %v349
    %v385 = vpop.f32.mrb[0].mxu0
    %v386 = vadd.f32 0.0, %v385
    %v387 = vpop.f32.mrb[0].mxu0
    %v388 = vpop.f32.mrb[0].mxu0
    %v389 = vpop.f32.mrb[0].mxu0
    %390 = vdwg.mxu0
    %392 = vrot.lane.b32.xlu0 %v386, 96
    %v393 = vpop.permute.xlu0 %392
    %v395 = vadd.f32 %v196, %v393
    %vm396 = vcmp.gt.f32.partialorder %v395, 0.0
    %v397 = vsel %vm396, 1.0, 0.2
    %v398 = vmul.f32 %v37, %v123
    %v399 = vsel %vm150, %v398, 0.0
    %400 = vadd.xlane.f32.xlu0 %v399
    %v401 = vpop.xlane.xlu0 %400
    %v402 = vmul.f32 %v401, 2.0
    %v403 = vmul.f32 %v402, %v123
    %v404 = vadd.f32 %v403, %v130
    %406 = vrot.lane.b32.xlu0 %v397, 32
    %v407 = vpop.permute.xlu0 %406
    %v409 = vmul.f32 %v137, %v407
    %v410 = vpack.c.bf16 %v409, %v409
    %v411 = vmul.f32 %v189, 2.0
    %413 = vrot.lane.b32.xlu0 %v411, 32
    %v414 = vpop.permute.xlu0 %413
    %v416 = vmul.f32 %v409, %v414
    %v417 = vpack.c.bf16 %v416, %v416
    %v422 = vunpack.c.l.b16 %v67
    %v423 = vunpack.c.l.b16 %v68
    %v424 = vunpack.c.l.b16 %v69
    %v425 = vunpack.c.l.b16 %v70
    %v426 = vpack.c.b16 %v423, %v422
    %v427 = vpack.c.b16 %v425, %v424
    %v431 = vsel %vm213, %v417, 0
    %433 = vmatprep.subr.bf16.mxu0 0
    %434 = vmatpush1.bf16.msra.mxu0 %v426
    %435 = vmatprep.subr.bf16.mxu0 0
    %436 = vmatpush1.bf16.msra.mxu0 %v427
    %437 = vmatprep.subr.bf16.mxu0 0
    %438 = vmatpush1.bf16.msra.mxu0 0
    %439 = vmatprep.subr.bf16.mxu0 0
    %440 = vmatpush1.bf16.msra.mxu0 0
    %441 = vmatprep.subr.bf16.mxu0 0
    %442 = vmatpush1.bf16.msra.mxu0 0
    %443 = vmatprep.subr.bf16.mxu0 0
    %444 = vmatpush1.bf16.msra.mxu0 0
    %445 = vmatprep.subr.bf16.mxu0 0
    %446 = vmatpush1.bf16.msra.mxu0 0
    %447 = vmatprep.subr.bf16.mxu0 0
    %448 = vmatpush1.bf16.msra.mxu0 0
    %449 = vmatprep.subr.bf16.mxu0 0
    %450 = vmatpush1.bf16.msra.mxu0 0
    %451 = vmatprep.subr.bf16.mxu0 0
    %452 = vmatpush1.bf16.msra.mxu0 0
    %453 = vmatprep.subr.bf16.mxu0 0
    %454 = vmatpush1.bf16.msra.mxu0 0
    %455 = vmatprep.subr.bf16.mxu0 0
    %456 = vmatpush1.bf16.msra.mxu0 0
    %457 = vmatprep.subr.bf16.mxu0 0
    %458 = vmatpush1.bf16.msra.mxu0 0
    %459 = vmatprep.subr.bf16.mxu0 0
    %460 = vmatpush1.bf16.msra.mxu0 0
    %461 = vmatprep.subr.bf16.mxu0 0
    %462 = vmatpush1.bf16.msra.mxu0 0
    %463 = vmatprep.subr.bf16.mxu0 0
    %464 = vmatpush1.bf16.msra.mxu0 0
    %465 = vmatprep.mubr.bf16.mxu0 0
    %466 = vmatmul.mubr.bf16.gmra.mrb[0].mxu0 %v431
    %v467 = vpop.f32.mrb[0].mxu0
    %v468 = vadd.f32 0.0, %v467
    %v469 = vpop.f32.mrb[0].mxu0
    %v470 = vpop.f32.mrb[0].mxu0
    %v471 = vpop.f32.mrb[0].mxu0
    %472 = vdwg.mxu0
    %v473 = vadd.f32 %v404, %v468
    %v478 = vunpack.c.l.b16 %v86
    %v479 = vunpack.c.l.b16 %v87
    %v480 = vunpack.c.l.b16 %v88
    %v481 = vunpack.c.l.b16 %v89
    %v482 = vpack.c.b16 %v479, %v478
    %v483 = vpack.c.b16 %v481, %v480
    %v487 = vsel %vm213, %v410, 0
    %489 = vmatprep.subr.bf16.mxu0 0
    %490 = vmatpush1.bf16.msra.mxu0 %v482
    %491 = vmatprep.subr.bf16.mxu0 0
    %492 = vmatpush1.bf16.msra.mxu0 %v483
    %493 = vmatprep.subr.bf16.mxu0 0
    %494 = vmatpush1.bf16.msra.mxu0 0
    %495 = vmatprep.subr.bf16.mxu0 0
    %496 = vmatpush1.bf16.msra.mxu0 0
    %497 = vmatprep.subr.bf16.mxu0 0
    %498 = vmatpush1.bf16.msra.mxu0 0
    %499 = vmatprep.subr.bf16.mxu0 0
    %500 = vmatpush1.bf16.msra.mxu0 0
    %501 = vmatprep.subr.bf16.mxu0 0
    %502 = vmatpush1.bf16.msra.mxu0 0
    %503 = vmatprep.subr.bf16.mxu0 0
    %504 = vmatpush1.bf16.msra.mxu0 0
    %505 = vmatprep.subr.bf16.mxu0 0
    %506 = vmatpush1.bf16.msra.mxu0 0
    %507 = vmatprep.subr.bf16.mxu0 0
    %508 = vmatpush1.bf16.msra.mxu0 0
    %509 = vmatprep.subr.bf16.mxu0 0
    %510 = vmatpush1.bf16.msra.mxu0 0
    %511 = vmatprep.subr.bf16.mxu0 0
    %512 = vmatpush1.bf16.msra.mxu0 0
    %513 = vmatprep.subr.bf16.mxu0 0
    %514 = vmatpush1.bf16.msra.mxu0 0
    %515 = vmatprep.subr.bf16.mxu0 0
    %516 = vmatpush1.bf16.msra.mxu0 0
    %517 = vmatprep.subr.bf16.mxu0 0
    %518 = vmatpush1.bf16.msra.mxu0 0
    %519 = vmatprep.subr.bf16.mxu0 0
    %520 = vmatpush1.bf16.msra.mxu0 0
    %521 = vmatprep.mubr.bf16.mxu0 0
    %522 = vmatmul.mubr.bf16.gmra.mrb[0].mxu0 %v487
    %v523 = vpop.f32.mrb[0].mxu0
    %v524 = vadd.f32 0.0, %v523
    %v525 = vpop.f32.mrb[0].mxu0
    %v526 = vpop.f32.mrb[0].mxu0
    %v527 = vpop.f32.mrb[0].mxu0
    %528 = vdwg.mxu0
    %v529 = vadd.f32 %v473, %v524
    %v534 = vunpack.c.l.b16 %v114
    %v535 = vunpack.c.l.b16 %v115
    %v536 = vunpack.c.l.b16 %v116
    %v537 = vunpack.c.l.b16 %v117
    %v538 = vpack.c.b16 %v535, %v534
    %v539 = vpack.c.b16 %v537, %v536
    %542 = vmatprep.subr.bf16.mxu0 0
    %543 = vmatpush1.bf16.msra.mxu0 %v538
    %544 = vmatprep.subr.bf16.mxu0 0
    %545 = vmatpush1.bf16.msra.mxu0 %v539
    %546 = vmatprep.subr.bf16.mxu0 0
    %547 = vmatpush1.bf16.msra.mxu0 0
    %548 = vmatprep.subr.bf16.mxu0 0
    %549 = vmatpush1.bf16.msra.mxu0 0
    %550 = vmatprep.subr.bf16.mxu0 0
    %551 = vmatpush1.bf16.msra.mxu0 0
    %552 = vmatprep.subr.bf16.mxu0 0
    %553 = vmatpush1.bf16.msra.mxu0 0
    %554 = vmatprep.subr.bf16.mxu0 0
    %555 = vmatpush1.bf16.msra.mxu0 0
    %556 = vmatprep.subr.bf16.mxu0 0
    %557 = vmatpush1.bf16.msra.mxu0 0
    %558 = vmatprep.subr.bf16.mxu0 0
    %559 = vmatpush1.bf16.msra.mxu0 0
    %560 = vmatprep.subr.bf16.mxu0 0
    %561 = vmatpush1.bf16.msra.mxu0 0
    %562 = vmatprep.subr.bf16.mxu0 0
    %563 = vmatpush1.bf16.msra.mxu0 0
    %564 = vmatprep.subr.bf16.mxu0 0
    %565 = vmatpush1.bf16.msra.mxu0 0
    %566 = vmatprep.subr.bf16.mxu0 0
    %567 = vmatpush1.bf16.msra.mxu0 0
    %568 = vmatprep.subr.bf16.mxu0 0
    %569 = vmatpush1.bf16.msra.mxu0 0
    %570 = vmatprep.subr.bf16.mxu0 0
    %571 = vmatpush1.bf16.msra.mxu0 0
    %572 = vmatprep.subr.bf16.mxu0 0
    %573 = vmatpush1.bf16.msra.mxu0 0
    %574 = vmatprep.mubr.bf16.mxu0 0
    %575 = vmatmul.mubr.bf16.gmra.mrb[0].mxu0 %v487
    %v576 = vpop.f32.mrb[0].mxu0
    %v577 = vadd.f32 0.0, %v576
    %v578 = vpop.f32.mrb[0].mxu0
    %v579 = vpop.f32.mrb[0].mxu0
    %v580 = vpop.f32.mrb[0].mxu0
    %581 = vdwg.mxu0
    %583 = vrot.lane.b32.xlu0 %v330, 64
    %v584 = vpop.permute.xlu0 %583
    %v586 = vmul.f32 %v577, %v584
    %v587 = vpack.c.bf16 %v586, %v586
    %588 = vrot.lane.b32.xlu0 %v411, 64
    %v589 = vpop.permute.xlu0 %588
    %v591 = vmul.f32 %v586, %v589
    %v592 = vpack.c.bf16 %v591, %v591
    %v597 = vunpack.c.l.b16 %v62
    %v598 = vunpack.c.l.b16 %v63
    %v599 = vunpack.c.l.b16 %v64
    %v600 = vunpack.c.l.b16 %v65
    %v601 = vpack.c.b16 %v598, %v597
    %v602 = vpack.c.b16 %v600, %v599
    %v606 = vsel %vm213, %v592, 0
    %608 = vmatprep.subr.bf16.mxu0 0
    %609 = vmatpush1.bf16.msra.mxu0 %v601
    %610 = vmatprep.subr.bf16.mxu0 0
    %611 = vmatpush1.bf16.msra.mxu0 %v602
    %612 = vmatprep.subr.bf16.mxu0 0
    %613 = vmatpush1.bf16.msra.mxu0 0
    %614 = vmatprep.subr.bf16.mxu0 0
    %615 = vmatpush1.bf16.msra.mxu0 0
    %616 = vmatprep.subr.bf16.mxu0 0
    %617 = vmatpush1.bf16.msra.mxu0 0
    %618 = vmatprep.subr.bf16.mxu0 0
    %619 = vmatpush1.bf16.msra.mxu0 0
    %620 = vmatprep.subr.bf16.mxu0 0
    %621 = vmatpush1.bf16.msra.mxu0 0
    %622 = vmatprep.subr.bf16.mxu0 0
    %623 = vmatpush1.bf16.msra.mxu0 0
    %624 = vmatprep.subr.bf16.mxu0 0
    %625 = vmatpush1.bf16.msra.mxu0 0
    %626 = vmatprep.subr.bf16.mxu0 0
    %627 = vmatpush1.bf16.msra.mxu0 0
    %628 = vmatprep.subr.bf16.mxu0 0
    %629 = vmatpush1.bf16.msra.mxu0 0
    %630 = vmatprep.subr.bf16.mxu0 0
    %631 = vmatpush1.bf16.msra.mxu0 0
    %632 = vmatprep.subr.bf16.mxu0 0
    %633 = vmatpush1.bf16.msra.mxu0 0
    %634 = vmatprep.subr.bf16.mxu0 0
    %635 = vmatpush1.bf16.msra.mxu0 0
    %636 = vmatprep.subr.bf16.mxu0 0
    %637 = vmatpush1.bf16.msra.mxu0 0
    %638 = vmatprep.subr.bf16.mxu0 0
    %639 = vmatpush1.bf16.msra.mxu0 0
    %640 = vmatprep.mubr.bf16.mxu0 0
    %641 = vmatmul.mubr.bf16.gmra.mrb[0].mxu0 %v606
    %v642 = vpop.f32.mrb[0].mxu0
    %v643 = vadd.f32 0.0, %v642
    %v644 = vpop.f32.mrb[0].mxu0
    %v645 = vpop.f32.mrb[0].mxu0
    %v646 = vpop.f32.mrb[0].mxu0
    %647 = vdwg.mxu0
    %v648 = vadd.f32 %v529, %v643
    %v653 = vunpack.c.l.b16 %v81
    %v654 = vunpack.c.l.b16 %v82
    %v655 = vunpack.c.l.b16 %v83
    %v656 = vunpack.c.l.b16 %v84
    %v657 = vpack.c.b16 %v654, %v653
    %v658 = vpack.c.b16 %v656, %v655
    %v662 = vsel %vm213, %v587, 0
    %664 = vmatprep.subr.bf16.mxu0 0
    %665 = vmatpush1.bf16.msra.mxu0 %v657
    %666 = vmatprep.subr.bf16.mxu0 0
    %667 = vmatpush1.bf16.msra.mxu0 %v658
    %668 = vmatprep.subr.bf16.mxu0 0
    %669 = vmatpush1.bf16.msra.mxu0 0
    %670 = vmatprep.subr.bf16.mxu0 0
    %671 = vmatpush1.bf16.msra.mxu0 0
    %672 = vmatprep.subr.bf16.mxu0 0
    %673 = vmatpush1.bf16.msra.mxu0 0
    %674 = vmatprep.subr.bf16.mxu0 0
    %675 = vmatpush1.bf16.msra.mxu0 0
    %676 = vmatprep.subr.bf16.mxu0 0
    %677 = vmatpush1.bf16.msra.mxu0 0
    %678 = vmatprep.subr.bf16.mxu0 0
    %679 = vmatpush1.bf16.msra.mxu0 0
    %680 = vmatprep.subr.bf16.mxu0 0
    %681 = vmatpush1.bf16.msra.mxu0 0
    %682 = vmatprep.subr.bf16.mxu0 0
    %683 = vmatpush1.bf16.msra.mxu0 0
    %684 = vmatprep.subr.bf16.mxu0 0
    %685 = vmatpush1.bf16.msra.mxu0 0
    %686 = vmatprep.subr.bf16.mxu0 0
    %687 = vmatpush1.bf16.msra.mxu0 0
    %688 = vmatprep.subr.bf16.mxu0 0
    %689 = vmatpush1.bf16.msra.mxu0 0
    %690 = vmatprep.subr.bf16.mxu0 0
    %691 = vmatpush1.bf16.msra.mxu0 0
    %692 = vmatprep.subr.bf16.mxu0 0
    %693 = vmatpush1.bf16.msra.mxu0 0
    %694 = vmatprep.subr.bf16.mxu0 0
    %695 = vmatpush1.bf16.msra.mxu0 0
    %696 = vmatprep.mubr.bf16.mxu0 0
    %697 = vmatmul.mubr.bf16.gmra.mrb[0].mxu0 %v662
    %v698 = vpop.f32.mrb[0].mxu0
    %v699 = vadd.f32 0.0, %v698
    %v700 = vpop.f32.mrb[0].mxu0
    %v701 = vpop.f32.mrb[0].mxu0
    %v702 = vpop.f32.mrb[0].mxu0
    %703 = vdwg.mxu0
    %v704 = vadd.f32 %v648, %v699
    %v709 = vunpack.c.l.b16 %v109
    %v710 = vunpack.c.l.b16 %v110
    %v711 = vunpack.c.l.b16 %v111
    %v712 = vunpack.c.l.b16 %v112
    %v713 = vpack.c.b16 %v710, %v709
    %v714 = vpack.c.b16 %v712, %v711
    %717 = vmatprep.subr.bf16.mxu0 0
    %718 = vmatpush1.bf16.msra.mxu0 %v713
    %719 = vmatprep.subr.bf16.mxu0 0
    %720 = vmatpush1.bf16.msra.mxu0 %v714
    %721 = vmatprep.subr.bf16.mxu0 0
    %722 = vmatpush1.bf16.msra.mxu0 0
    %723 = vmatprep.subr.bf16.mxu0 0
    %724 = vmatpush1.bf16.msra.mxu0 0
    %725 = vmatprep.subr.bf16.mxu0 0
    %726 = vmatpush1.bf16.msra.mxu0 0
    %727 = vmatprep.subr.bf16.mxu0 0
    %728 = vmatpush1.bf16.msra.mxu0 0
    %729 = vmatprep.subr.bf16.mxu0 0
    %730 = vmatpush1.bf16.msra.mxu0 0
    %731 = vmatprep.subr.bf16.mxu0 0
    %732 = vmatpush1.bf16.msra.mxu0 0
    %733 = vmatprep.subr.bf16.mxu0 0
    %734 = vmatpush1.bf16.msra.mxu0 0
    %735 = vmatprep.subr.bf16.mxu0 0
    %736 = vmatpush1.bf16.msra.mxu0 0
    %737 = vmatprep.subr.bf16.mxu0 0
    %738 = vmatpush1.bf16.msra.mxu0 0
    %739 = vmatprep.subr.bf16.mxu0 0
    %740 = vmatpush1.bf16.msra.mxu0 0
    %741 = vmatprep.subr.bf16.mxu0 0
    %742 = vmatpush1.bf16.msra.mxu0 0
    %743 = vmatprep.subr.bf16.mxu0 0
    %744 = vmatpush1.bf16.msra.mxu0 0
    %745 = vmatprep.subr.bf16.mxu0 0
    %746 = vmatpush1.bf16.msra.mxu0 0
    %747 = vmatprep.subr.bf16.mxu0 0
    %748 = vmatpush1.bf16.msra.mxu0 0
    %749 = vmatprep.mubr.bf16.mxu0 0
    %750 = vmatmul.mubr.bf16.gmra.mrb[0].mxu0 %v662
    %v751 = vpop.f32.mrb[0].mxu0
    %v752 = vadd.f32 0.0, %v751
    %v753 = vpop.f32.mrb[0].mxu0
    %v754 = vpop.f32.mrb[0].mxu0
    %v755 = vpop.f32.mrb[0].mxu0
    %756 = vdwg.mxu0
    %758 = vrot.lane.b32.xlu0 %v263, 96
    %v759 = vpop.permute.xlu0 %758
    %v761 = vmul.f32 %v752, %v759
    %v762 = vpack.c.bf16 %v761, %v761
    %763 = vrot.lane.b32.xlu0 %v411, 96
    %v764 = vpop.permute.xlu0 %763
    %v766 = vmul.f32 %v761, %v764
    %v767 = vpack.c.bf16 %v766, %v766
    %v772 = vunpack.c.l.b16 %v57
    %v773 = vunpack.c.l.b16 %v58
    %v774 = vunpack.c.l.b16 %v59
    %v775 = vunpack.c.l.b16 %v60
    %v776 = vpack.c.b16 %v773, %v772
    %v777 = vpack.c.b16 %v775, %v774
    %v781 = vsel %vm213, %v767, 0
    %783 = vmatprep.subr.bf16.mxu0 0
    %784 = vmatpush1.bf16.msra.mxu0 %v776
    %785 = vmatprep.subr.bf16.mxu0 0
    %786 = vmatpush1.bf16.msra.mxu0 %v777
    %787 = vmatprep.subr.bf16.mxu0 0
    %788 = vmatpush1.bf16.msra.mxu0 0
    %789 = vmatprep.subr.bf16.mxu0 0
    %790 = vmatpush1.bf16.msra.mxu0 0
    %791 = vmatprep.subr.bf16.mxu0 0
    %792 = vmatpush1.bf16.msra.mxu0 0
    %793 = vmatprep.subr.bf16.mxu0 0
    %794 = vmatpush1.bf16.msra.mxu0 0
    %795 = vmatprep.subr.bf16.mxu0 0
    %796 = vmatpush1.bf16.msra.mxu0 0
    %797 = vmatprep.subr.bf16.mxu0 0
    %798 = vmatpush1.bf16.msra.mxu0 0
    %799 = vmatprep.subr.bf16.mxu0 0
    %800 = vmatpush1.bf16.msra.mxu0 0
    %801 = vmatprep.subr.bf16.mxu0 0
    %802 = vmatpush1.bf16.msra.mxu0 0
    %803 = vmatprep.subr.bf16.mxu0 0
    %804 = vmatpush1.bf16.msra.mxu0 0
    %805 = vmatprep.subr.bf16.mxu0 0
    %806 = vmatpush1.bf16.msra.mxu0 0
    %807 = vmatprep.subr.bf16.mxu0 0
    %808 = vmatpush1.bf16.msra.mxu0 0
    %809 = vmatprep.subr.bf16.mxu0 0
    %810 = vmatpush1.bf16.msra.mxu0 0
    %811 = vmatprep.subr.bf16.mxu0 0
    %812 = vmatpush1.bf16.msra.mxu0 0
    %813 = vmatprep.subr.bf16.mxu0 0
    %814 = vmatpush1.bf16.msra.mxu0 0
    %815 = vmatprep.mubr.bf16.mxu0 0
    %816 = vmatmul.mubr.bf16.gmra.mrb[0].mxu0 %v781
    %v817 = vpop.f32.mrb[0].mxu0
    %v818 = vadd.f32 0.0, %v817
    %v819 = vpop.f32.mrb[0].mxu0
    %v820 = vpop.f32.mrb[0].mxu0
    %v821 = vpop.f32.mrb[0].mxu0
    %822 = vdwg.mxu0
    %v823 = vadd.f32 %v704, %v818
    %v828 = vunpack.c.l.b16 %v76
    %v829 = vunpack.c.l.b16 %v77
    %v830 = vunpack.c.l.b16 %v78
    %v831 = vunpack.c.l.b16 %v79
    %v832 = vpack.c.b16 %v829, %v828
    %v833 = vpack.c.b16 %v831, %v830
    %v837 = vsel %vm213, %v762, 0
    %839 = vmatprep.subr.bf16.mxu0 0
    %840 = vmatpush1.bf16.msra.mxu0 %v832
    %841 = vmatprep.subr.bf16.mxu0 0
    %842 = vmatpush1.bf16.msra.mxu0 %v833
    %843 = vmatprep.subr.bf16.mxu0 0
    %844 = vmatpush1.bf16.msra.mxu0 0
    %845 = vmatprep.subr.bf16.mxu0 0
    %846 = vmatpush1.bf16.msra.mxu0 0
    %847 = vmatprep.subr.bf16.mxu0 0
    %848 = vmatpush1.bf16.msra.mxu0 0
    %849 = vmatprep.subr.bf16.mxu0 0
    %850 = vmatpush1.bf16.msra.mxu0 0
    %851 = vmatprep.subr.bf16.mxu0 0
    %852 = vmatpush1.bf16.msra.mxu0 0
    %853 = vmatprep.subr.bf16.mxu0 0
    %854 = vmatpush1.bf16.msra.mxu0 0
    %855 = vmatprep.subr.bf16.mxu0 0
    %856 = vmatpush1.bf16.msra.mxu0 0
    %857 = vmatprep.subr.bf16.mxu0 0
    %858 = vmatpush1.bf16.msra.mxu0 0
    %859 = vmatprep.subr.bf16.mxu0 0
    %860 = vmatpush1.bf16.msra.mxu0 0
    %861 = vmatprep.subr.bf16.mxu0 0
    %862 = vmatpush1.bf16.msra.mxu0 0
    %863 = vmatprep.subr.bf16.mxu0 0
    %864 = vmatpush1.bf16.msra.mxu0 0
    %865 = vmatprep.subr.bf16.mxu0 0
    %866 = vmatpush1.bf16.msra.mxu0 0
    %867 = vmatprep.subr.bf16.mxu0 0
    %868 = vmatpush1.bf16.msra.mxu0 0
    %869 = vmatprep.subr.bf16.mxu0 0
    %870 = vmatpush1.bf16.msra.mxu0 0
    %871 = vmatprep.mubr.bf16.mxu0 0
    %872 = vmatmul.mubr.bf16.gmra.mrb[0].mxu0 %v837
    %v873 = vpop.f32.mrb[0].mxu0
    %v874 = vadd.f32 0.0, %v873
    %v875 = vpop.f32.mrb[0].mxu0
    %v876 = vpop.f32.mrb[0].mxu0
    %v877 = vpop.f32.mrb[0].mxu0
    %878 = vdwg.mxu0
    %v879 = vadd.f32 %v823, %v874
    %v884 = vunpack.c.l.b16 %v104
    %v885 = vunpack.c.l.b16 %v105
    %v886 = vunpack.c.l.b16 %v106
    %v887 = vunpack.c.l.b16 %v107
    %v888 = vpack.c.b16 %v885, %v884
    %v889 = vpack.c.b16 %v887, %v886
    %892 = vmatprep.subr.bf16.mxu0 0
    %893 = vmatpush1.bf16.msra.mxu0 %v888
    %894 = vmatprep.subr.bf16.mxu0 0
    %895 = vmatpush1.bf16.msra.mxu0 %v889
    %896 = vmatprep.subr.bf16.mxu0 0
    %897 = vmatpush1.bf16.msra.mxu0 0
    %898 = vmatprep.subr.bf16.mxu0 0
    %899 = vmatpush1.bf16.msra.mxu0 0
    %900 = vmatprep.subr.bf16.mxu0 0
    %901 = vmatpush1.bf16.msra.mxu0 0
    %902 = vmatprep.subr.bf16.mxu0 0
    %903 = vmatpush1.bf16.msra.mxu0 0
    %904 = vmatprep.subr.bf16.mxu0 0
    %905 = vmatpush1.bf16.msra.mxu0 0
    %906 = vmatprep.subr.bf16.mxu0 0
    %907 = vmatpush1.bf16.msra.mxu0 0
    %908 = vmatprep.subr.bf16.mxu0 0
    %909 = vmatpush1.bf16.msra.mxu0 0
    %910 = vmatprep.subr.bf16.mxu0 0
    %911 = vmatpush1.bf16.msra.mxu0 0
    %912 = vmatprep.subr.bf16.mxu0 0
    %913 = vmatpush1.bf16.msra.mxu0 0
    %914 = vmatprep.subr.bf16.mxu0 0
    %915 = vmatpush1.bf16.msra.mxu0 0
    %916 = vmatprep.subr.bf16.mxu0 0
    %917 = vmatpush1.bf16.msra.mxu0 0
    %918 = vmatprep.subr.bf16.mxu0 0
    %919 = vmatpush1.bf16.msra.mxu0 0
    %920 = vmatprep.subr.bf16.mxu0 0
    %921 = vmatpush1.bf16.msra.mxu0 0
    %922 = vmatprep.subr.bf16.mxu0 0
    %923 = vmatpush1.bf16.msra.mxu0 0
    %924 = vmatprep.mubr.bf16.mxu0 0
    %925 = vmatmul.mubr.bf16.gmra.mrb[0].mxu0 %v837
    %v926 = vpop.f32.mrb[0].mxu0
    %v927 = vadd.f32 0.0, %v926
    %v928 = vpop.f32.mrb[0].mxu0
    %v929 = vpop.f32.mrb[0].mxu0
    %v930 = vpop.f32.mrb[0].mxu0
    %931 = vdwg.mxu0
    %v932 = vmul.f32 %v927, %v198
    %v933 = vpack.c.bf16 %v932, %v932
    %v934 = vmul.f32 %v932, %v411
    %v935 = vpack.c.bf16 %v934, %v934
    %v940 = vunpack.c.l.b16 %v52
    %v941 = vunpack.c.l.b16 %v53
    %v942 = vunpack.c.l.b16 %v54
    %v943 = vunpack.c.l.b16 %v55
    %v944 = vpack.c.b16 %v941, %v940
    %v945 = vpack.c.b16 %v943, %v942
    %v949 = vsel %vm213, %v935, 0
    %951 = vmatprep.subr.bf16.mxu0 0
    %952 = vmatpush1.bf16.msra.mxu0 %v944
    %953 = vmatprep.subr.bf16.mxu0 0
    %954 = vmatpush1.bf16.msra.mxu0 %v945
    %955 = vmatprep.subr.bf16.mxu0 0
    %956 = vmatpush1.bf16.msra.mxu0 0
    %957 = vmatprep.subr.bf16.mxu0 0
    %958 = vmatpush1.bf16.msra.mxu0 0
    %959 = vmatprep.subr.bf16.mxu0 0
    %960 = vmatpush1.bf16.msra.mxu0 0
    %961 = vmatprep.subr.bf16.mxu0 0
    %962 = vmatpush1.bf16.msra.mxu0 0
    %963 = vmatprep.subr.bf16.mxu0 0
    %964 = vmatpush1.bf16.msra.mxu0 0
    %965 = vmatprep.subr.bf16.mxu0 0
    %966 = vmatpush1.bf16.msra.mxu0 0
    %967 = vmatprep.subr.bf16.mxu0 0
    %968 = vmatpush1.bf16.msra.mxu0 0
    %969 = vmatprep.subr.bf16.mxu0 0
    %970 = vmatpush1.bf16.msra.mxu0 0
    %971 = vmatprep.subr.bf16.mxu0 0
    %972 = vmatpush1.bf16.msra.mxu0 0
    %973 = vmatprep.subr.bf16.mxu0 0
    %974 = vmatpush1.bf16.msra.mxu0 0
    %975 = vmatprep.subr.bf16.mxu0 0
    %976 = vmatpush1.bf16.msra.mxu0 0
    %977 = vmatprep.subr.bf16.mxu0 0
    %978 = vmatpush1.bf16.msra.mxu0 0
    %979 = vmatprep.subr.bf16.mxu0 0
    %980 = vmatpush1.bf16.msra.mxu0 0
    %981 = vmatprep.subr.bf16.mxu0 0
    %982 = vmatpush1.bf16.msra.mxu0 0
    %983 = vmatprep.mubr.bf16.mxu0 0
    %984 = vmatmul.mubr.bf16.gmra.mrb[0].mxu0 %v949
    %v985 = vpop.f32.mrb[0].mxu0
    %v986 = vadd.f32 0.0, %v985
    %v987 = vpop.f32.mrb[0].mxu0
    %v988 = vpop.f32.mrb[0].mxu0
    %v989 = vpop.f32.mrb[0].mxu0
    %990 = vdwg.mxu0
    %v991 = vadd.f32 %v879, %v986
    %v996 = vunpack.c.l.b16 %v71
    %v997 = vunpack.c.l.b16 %v72
    %v998 = vunpack.c.l.b16 %v73
    %v999 = vunpack.c.l.b16 %v74
    %v1000 = vpack.c.b16 %v997, %v996
    %v1001 = vpack.c.b16 %v999, %v998
    %v1005 = vsel %vm213, %v933, 0
    %1007 = vmatprep.subr.bf16.mxu0 0
    %1008 = vmatpush1.bf16.msra.mxu0 %v1000
    %1009 = vmatprep.subr.bf16.mxu0 0
    %1010 = vmatpush1.bf16.msra.mxu0 %v1001
    %1011 = vmatprep.subr.bf16.mxu0 0
    %1012 = vmatpush1.bf16.msra.mxu0 0
    %1013 = vmatprep.subr.bf16.mxu0 0
    %1014 = vmatpush1.bf16.msra.mxu0 0
    %1015 = vmatprep.subr.bf16.mxu0 0
    %1016 = vmatpush1.bf16.msra.mxu0 0
    %1017 = vmatprep.subr.bf16.mxu0 0
    %1018 = vmatpush1.bf16.msra.mxu0 0
    %1019 = vmatprep.subr.bf16.mxu0 0
    %1020 = vmatpush1.bf16.msra.mxu0 0
    %1021 = vmatprep.subr.bf16.mxu0 0
    %1022 = vmatpush1.bf16.msra.mxu0 0
    %1023 = vmatprep.subr.bf16.mxu0 0
    %1024 = vmatpush1.bf16.msra.mxu0 0
    %1025 = vmatprep.subr.bf16.mxu0 0
    %1026 = vmatpush1.bf16.msra.mxu0 0
    %1027 = vmatprep.subr.bf16.mxu0 0
    %1028 = vmatpush1.bf16.msra.mxu0 0
    %1029 = vmatprep.subr.bf16.mxu0 0
    %1030 = vmatpush1.bf16.msra.mxu0 0
    %1031 = vmatprep.subr.bf16.mxu0 0
    %1032 = vmatpush1.bf16.msra.mxu0 0
    %1033 = vmatprep.subr.bf16.mxu0 0
    %1034 = vmatpush1.bf16.msra.mxu0 0
    %1035 = vmatprep.subr.bf16.mxu0 0
    %1036 = vmatpush1.bf16.msra.mxu0 0
    %1037 = vmatprep.subr.bf16.mxu0 0
    %1038 = vmatpush1.bf16.msra.mxu0 0
    %1039 = vmatprep.mubr.bf16.mxu0 0
    %1040 = vmatmul.mubr.bf16.gmra.mrb[0].mxu0 %v1005
    %v1041 = vpop.f32.mrb[0].mxu0
    %v1042 = vadd.f32 0.0, %v1041
    %v1043 = vpop.f32.mrb[0].mxu0
    %v1044 = vpop.f32.mrb[0].mxu0
    %v1045 = vpop.f32.mrb[0].mxu0
    %1046 = vdwg.mxu0
    %v1047 = vadd.f32 %v991, %v1042
    %v1048 = vmul.f32 %v1047, 0.5
    %v1049 = vmul.f32 %v37, 0.5
    %v1050 = vadd.f32 %v1048, %v1049
    %1051 = vst.msk [vmem:[#allocation2] sm:$0xff] %vm150, %v1050
    // Predicated region
    $region42: #{tpu_custom_call.1} parent=1 // pred_check
      _
    $region43: #{tpu_custom_call.1} parent=1 // pred_check_branch
      %1053 = sbr.rel (0) target = $region45
    $region44: #{tpu_custom_call.1} parent=1 // pred_region
      %s1055 = ssub.s32 128, 128
      %1056 = vsyncadd [#allocation3], %s1055
      %s1058 = sshll.u32 [#allocation2], 4
      %s1059 = int_to_ptr.vmem [resolvable:$true] %s1058
      %1061 = dma.vmem_to_hbm [thread:$0]  %s1059, 128, %s10, [#allocation3]
    $region45: #{tpu_custom_call.1} parent=1 // pred_fallthru
      _
    // Predicated region
    $region46: #{tpu_custom_call.1} parent=1 // pred_check
      _
    $region47: #{tpu_custom_call.1} parent=1 // pred_check_branch
      %1063 = sbr.rel (0) target = $region49
    $region48: #{tpu_custom_call.1} parent=1 // pred_region
      %1064 = dma.done [#allocation3], 128
    $region49: #{tpu_custom_call.1} parent=1 // pred_fallthru
      _
    %1065 = vsyncpa [#allocation3], 1

</llo_original>
